<compile_context>
chip_gen: v5e
topology: v5e:2x2
jax: 0.10.0
libtpu: 0.0.40
codegen_flags: <defaults>
</compile_context>

<pallas_src>
import functools

import jax
import jax.numpy as jnp
from jax import lax
from jax.experimental import pallas as pl
from jax.experimental.pallas import tpu as pltpu

_EPS = 1e-12  # matches torch.nn.functional.normalize default eps


def _round_up(n: int, m: int) -> int:
    return ((n + m - 1) // m) * m


def _pick_tile(dim: int, cap: int, unit: int):
    """Pick (tile, padded_dim) for one axis.

    If the whole axis fits under `cap`, use the full axis (a block dim equal to the
    full array dim is exempt from the (8,128) divisibility rule -> no padding).
    Otherwise prefer the largest multiple of `unit` <= cap that divides the
    unit-rounded axis (avoids padding the big W tensor); if no divisor >= cap/2
    exists, fall back to the cap and pad the axis up to a multiple of it.
    """
    if dim <= cap:
        return dim, dim
    cap = max(unit, (cap // unit) * unit)
    padded = _round_up(dim, unit)
    t = cap
    while t >= max(unit, cap // 2):
        if padded % t == 0:
            return t, padded
        t -= unit
    return cap, _round_up(dim, cap)


def _fc_cosine_kernel(x_ref, w_ref, o_ref, xss_ref, wss_ref, *, use_bf16: bool):
    """One (i, j, k) grid step.

    x_ref: [tm, tk] f32    w_ref: [tk, tn] f32    o_ref: [tm, tn] f32 (acts as accumulator)
    xss_ref: [tm, 1]  f32 partial sum(x^2) over K
    wss_ref: [1, tn]  f32 partial sum(w^2) over K
    """
    k = pl.program_id(2)

    @pl.when(k == 0)
    def _init():
        o_ref[...] = jnp.zeros_like(o_ref)
        xss_ref[...] = jnp.zeros_like(xss_ref)
        wss_ref[...] = jnp.zeros_like(wss_ref)

    x = x_ref[...]  # [tm, tk] f32
    w = w_ref[...]  # [tk, tn] f32

    if use_bf16:
        # bf16-native MXU path; f32 accumulation.
        part = jnp.dot(
            x.astype(jnp.bfloat16),
            w.astype(jnp.bfloat16),
            preferred_element_type=jnp.float32,
        )
    else:
        # Exact-parity f32 path.
        part = jnp.dot(
            x, w,
            preferred_element_type=jnp.float32,
            precision=lax.Precision.HIGHEST,
        )

    # Accumulate directly into the resident output block (f32, index invariant in k).
    o_ref[...] += part
    # Sums-of-squares from the original f32 tiles (exact norms).
    xss_ref[...] += jnp.sum(x * x, axis=-1, keepdims=True)   # [tm, 1]
    wss_ref[...] += jnp.sum(w * w, axis=0, keepdims=True)    # [1, tn]

    @pl.when(k == pl.num_programs(2) - 1)
    def _finalize():
        # sqrt(max(ss, eps^2)) == max(||.||, eps)  ->  exact torch.normalize semantics.
        inv_x = lax.rsqrt(jnp.maximum(xss_ref[...], _EPS * _EPS))  # [tm, 1] (EUP)
        inv_w = lax.rsqrt(jnp.maximum(wss_ref[...], _EPS * _EPS))  # [1, tn] (EUP)
        o_ref[...] = jnp.clip(o_ref[...] * inv_x * inv_w, -1.0, 1.0)


@functools.partial(jax.jit, static_argnames=("use_bf16_matmul",))
def fc_cosine(x: jax.Array, weights: jax.Array, *, use_bf16_matmul: bool = True) -> jax.Array:
    """Pallas implementation of FC.forward.

    x:       [B, in_dim]       float32
    weights: [in_dim, out_dim] float32
    returns  [B, out_dim]      float32
    """
    B, in_dim = x.shape
    in_dim_w, out_dim = weights.shape
    assert in_dim == in_dim_w, (in_dim, in_dim_w)

    x = x.astype(jnp.float32)
    weights = weights.astype(jnp.float32)

    # ---- Generation-aware VMEM budget / tile caps ----
    vmem_bytes = 64 * 1024 * 1024  # conservative fallback (v7x-sized)
    try:
        vmem_bytes = int(pltpu.get_tpu_info().vmem_capacity_bytes)
    except Exception:
        pass
    if vmem_bytes >= 100 * 1024 * 1024:        # v5e / v6e class: 128 MiB physical VMEM
        tm_cap, tn_cap, tk_cap = 512, 1024, 1024
        vmem_limit = 96 * 1024 * 1024
    else:                                      # v7x class: 64 MiB physical VMEM
        tm_cap, tn_cap, tk_cap = 512, 1024, 512
        vmem_limit = 48 * 1024 * 1024

    tm, B_pad = _pick_tile(B, tm_cap, 8)          # sublane dim of x / out
    tn, out_pad = _pick_tile(out_dim, tn_cap, 128)  # lane dim of out (dense when >=128)
    tk, in_pad = _pick_tile(in_dim, tk_cap, 128)    # reduction dim

    # Megacore (v7x has 2 TensorCores): guarantee >=2 blocks along a parallel axis
    # whenever the tile choice would otherwise give a (1, 1, K) grid (only when the
    # halved tile stays (8,128)-legal).
    if (B_pad // tm) * (out_pad // tn) == 1:
        if tn % 256 == 0:
            tn //= 2
        elif tm % 16 == 0:
            tm //= 2

    # Padding (only when needed; small shapes take the full-dim blocks and skip this).
    # Zero-padding is exact: padded K contributes 0 to both dot and sums-of-squares,
    # padded rows/cols of the output are finite (0 * 1/eps = 0) and sliced off below.
    # TODO(synk): mask the K tail in-kernel (broadcasted_iota) to avoid the W pad copy
    # for very large, non-128-aligned in_dim.
    if (B_pad, in_pad) != (B, in_dim):
        x = jnp.pad(x, ((0, B_pad - B), (0, in_pad - in_dim)))
    if (in_pad, out_pad) != (in_dim, out_dim):
        weights = jnp.pad(weights, ((0, in_pad - in_dim), (0, out_pad - out_dim)))

    grid = (B_pad // tm, out_pad // tn, in_pad // tk)  # reduction axis (K) innermost
    gi, gj, _ = grid

    cost = pl.CostEstimate(
        flops=2 * B_pad * in_pad * out_pad,
        transcendentals=gi * gj * (tm + tn),  # per-(i,j)-tile rsqrt passes
        bytes_accessed=4 * (
            gj * B_pad * in_pad          # x is re-read once per j block
            + gi * in_pad * out_pad      # W is re-read once per i block
            + B_pad * out_pad            # output written once
        ),
    )

    kernel = functools.partial(_fc_cosine_kernel, use_bf16=use_bf16_matmul)

    out = pl.pallas_call(
        kernel,
        out_shape=jax.ShapeDtypeStruct((B_pad, out_pad), jnp.float32),
        grid_spec=pltpu.PrefetchScalarGridSpec(
            num_scalar_prefetch=0,
            grid=grid,
            in_specs=[
                pl.BlockSpec((tm, tk), lambda i, j, k: (i, k)),
                # W index_map is invariant in the batch axis i.
                pl.BlockSpec((tk, tn), lambda i, j, k: (k, j)),
            ],
            out_specs=pl.BlockSpec((tm, tn), lambda i, j, k: (i, j)),
            scratch_shapes=[
                pltpu.VMEM((tm, 1), jnp.float32),   # sum(x^2) over K
                pltpu.VMEM((1, tn), jnp.float32),   # sum(w^2) over K
            ],
        ),
        compiler_params=pltpu.CompilerParams(
            dimension_semantics=("parallel", "parallel", "arbitrary"),
            vmem_limit_bytes=vmem_limit,
        ),
        cost_estimate=cost,
    )(x, weights)

    if (B_pad, out_pad) != (B, out_dim):
        out = out[:B, :out_dim]
    return out


def fc_cosine_ref(x, weights):
    # Pure-JAX reference of the PyTorch forward (for correctness check).
    x_n = x / jnp.maximum(jnp.linalg.norm(x, axis=-1, keepdims=True), _EPS)
    w_n = weights / jnp.maximum(
        jnp.linalg.norm(weights, axis=0, keepdims=True), _EPS
    )
    return jnp.clip(x_n @ w_n, -1.0, 1.0)


if __name__ == "__main__":
    key = jax.random.PRNGKey(0)
    k_x, k_w = jax.random.split(key)

    B, in_dim, out_dim = 8, 32, 64

    x = jax.random.normal(k_x, (B, in_dim), dtype=jnp.float32)
    # nn.init.normal_(self.weights, std=0.01)
    weights = 0.01 * jax.random.normal(k_w, (in_dim, out_dim), dtype=jnp.float32)

    ref = fc_cosine_ref(x, weights)

    # Default (fast) path: bf16 MXU matmul, f32 accumulation + exact f32 norms.
    out = jax.block_until_ready(fc_cosine(x, weights))
    assert out.shape == (B, out_dim), out.shape
    assert bool(jnp.all(jnp.isfinite(out)))
    assert jnp.allclose(out, ref, atol=2e-2, rtol=0.0), float(
        jnp.max(jnp.abs(out - ref))
    )

    # Exact-parity path: full f32 MXU matmul.
    out_exact = jax.block_until_ready(fc_cosine(x, weights, use_bf16_matmul=False))
    assert jnp.allclose(out_exact, ref, atol=2e-5, rtol=1e-5), float(
        jnp.max(jnp.abs(out_exact - ref))
    )

    print("KERNEL_OK")
</pallas_src>

<mosaic_0001>
module attributes {stable_mosaic.version = 11 : i64} {
  func.func @_fc_cosine_kernel(%arg0: i32, %arg1: i32, %arg2: i32, %arg3: memref<8x32xf32, #tpu.memory_space<vmem>>, %arg4: memref<32x64xf32, #tpu.memory_space<vmem>>, %arg5: memref<8x64xf32, #tpu.memory_space<vmem>>, %arg6: memref<8x1xf32, #tpu.memory_space<vmem>>, %arg7: memref<1x64xf32, #tpu.memory_space<vmem>>) attributes {dimension_semantics = [#tpu.dimension_semantics<parallel>, #tpu.dimension_semantics<parallel>, #tpu.dimension_semantics<arbitrary>], iteration_bounds = array<i64: 1, 1, 1>, scalar_prefetch = 0 : i64, scratch_operands = 2 : i64, tpu.core_type = #tpu.core_type<tc>, window_params = [{transform_indices = @transform_0, window_bounds = array<i64: 8, 32>}, {transform_indices = @transform_1, window_bounds = array<i64: 32, 64>}, {transform_indices = @transform_2, window_bounds = array<i64: 8, 64>}]} {
    %c0_i32 = arith.constant 0 : i32
    %0 = arith.cmpi eq, %arg2, %c0_i32 : i32
    %1 = arith.extui %0 : i1 to i32
    %c0_i32_0 = arith.constant 0 : i32
    %2 = arith.cmpi ne, %1, %c0_i32_0 : i32
    scf.if %2 {
      %cst_20 = arith.constant 0.000000e+00 : f32
      %26 = vector.broadcast %cst_20 : f32 to vector<8x64xf32>
      %c0_21 = arith.constant 0 : index
      %c0_22 = arith.constant 0 : index
      %27 = vector.load %arg5[%c0_21, %c0_22] : memref<8x64xf32, #tpu.memory_space<vmem>>, vector<8x64xf32>
      tpu.vector_store %arg5[%c0_21, %c0_22], %26 {strides = array<i32>} : memref<8x64xf32, #tpu.memory_space<vmem>>, vector<8x64xf32>,
      %cst_23 = arith.constant 0.000000e+00 : f32
      %28 = vector.broadcast %cst_23 : f32 to vector<8x1xf32>
      %c0_24 = arith.constant 0 : index
      %c0_25 = arith.constant 0 : index
      %29 = vector.load %arg6[%c0_24, %c0_25] : memref<8x1xf32, #tpu.memory_space<vmem>>, vector<8x1xf32>
      tpu.vector_store %arg6[%c0_24, %c0_25], %28 {strides = array<i32>} : memref<8x1xf32, #tpu.memory_space<vmem>>, vector<8x1xf32>,
      %cst_26 = arith.constant 0.000000e+00 : f32
      %30 = vector.broadcast %cst_26 : f32 to vector<1x64xf32>
      %c0_27 = arith.constant 0 : index
      %c0_28 = arith.constant 0 : index
      %31 = vector.load %arg7[%c0_27, %c0_28] : memref<1x64xf32, #tpu.memory_space<vmem>>, vector<1x64xf32>
      tpu.vector_store %arg7[%c0_27, %c0_28], %30 {strides = array<i32>} : memref<1x64xf32, #tpu.memory_space<vmem>>, vector<1x64xf32>,
    } else {
    }
    %c0 = arith.constant 0 : index
    %c0_1 = arith.constant 0 : index
    %3 = vector.load %arg3[%c0, %c0_1] : memref<8x32xf32, #tpu.memory_space<vmem>>, vector<8x32xf32>
    %c0_2 = arith.constant 0 : index
    %c0_3 = arith.constant 0 : index
    %4 = vector.load %arg4[%c0_2, %c0_3] : memref<32x64xf32, #tpu.memory_space<vmem>>, vector<32x64xf32>
    %5 = arith.truncf %3 : vector<8x32xf32> to vector<8x32xbf16>
    %6 = arith.truncf %4 : vector<32x64xf32> to vector<32x64xbf16>
    %cst = arith.constant dense<0.000000e+00> : vector<8x64xf32>
    %7 = tpu.matmul %5, %6, %cst {dimension_numbers = #tpu.dot_dimension_numbers<[1], [0], [0], [1], [0, 0, 1, 1], [], []>} : vector<8x32xbf16>, vector<32x64xbf16>, vector<8x64xf32> -> vector<8x64xf32>
    %c0_4 = arith.constant 0 : index
    %c0_5 = arith.constant 0 : index
    %8 = vector.load %arg5[%c0_4, %c0_5] : memref<8x64xf32, #tpu.memory_space<vmem>>, vector<8x64xf32>
    %9 = arith.addf %8, %7 : vector<8x64xf32>
    %c0_6 = arith.constant 0 : index
    %c0_7 = arith.constant 0 : index
    %10 = vector.load %arg5[%c0_6, %c0_7] : memref<8x64xf32, #tpu.memory_space<vmem>>, vector<8x64xf32>
    tpu.vector_store %arg5[%c0_6, %c0_7], %9 {strides = array<i32>} : memref<8x64xf32, #tpu.memory_space<vmem>>, vector<8x64xf32>,
    %c0_8 = arith.constant 0 : index
    %c0_9 = arith.constant 0 : index
    %11 = vector.load %arg6[%c0_8, %c0_9] : memref<8x1xf32, #tpu.memory_space<vmem>>, vector<8x1xf32>
    %12 = arith.mulf %3, %3 : vector<8x32xf32>
    %cst_10 = arith.constant dense<0.000000e+00> : vector<8xf32>
    %13 = vector.multi_reduction <add>, %12, %cst_10 [1] : vector<8x32xf32> to vector<8xf32>
    %14 = vector.shape_cast %13 : vector<8xf32> to vector<8x1xf32>
    %15 = arith.addf %11, %14 : vector<8x1xf32>
    %c0_11 = arith.constant 0 : index
    %c0_12 = arith.constant 0 : index
    %16 = vector.load %arg6[%c0_11, %c0_12] : memref<8x1xf32, #tpu.memory_space<vmem>>, vector<8x1xf32>
    tpu.vector_store %arg6[%c0_11, %c0_12], %15 {strides = array<i32>} : memref<8x1xf32, #tpu.memory_space<vmem>>, vector<8x1xf32>,
    %c0_13 = arith.constant 0 : index
    %c0_14 = arith.constant 0 : index
    %17 = vector.load %arg7[%c0_13, %c0_14] : memref<1x64xf32, #tpu.memory_space<vmem>>, vector<1x64xf32>
    %18 = arith.mulf %4, %4 : vector<32x64xf32>
    %cst_15 = arith.constant dense<0.000000e+00> : vector<64xf32>
    %19 = vector.multi_reduction <add>, %18, %cst_15 [0] : vector<32x64xf32> to vector<64xf32>
    %20 = vector.shape_cast %19 : vector<64xf32> to vector<1x64xf32>
    %21 = arith.addf %17, %20 : vector<1x64xf32>
    %c0_16 = arith.constant 0 : index
    %c0_17 = arith.constant 0 : index
    %22 = vector.load %arg7[%c0_16, %c0_17] : memref<1x64xf32, #tpu.memory_space<vmem>>, vector<1x64xf32>
    tpu.vector_store %arg7[%c0_16, %c0_17], %21 {strides = array<i32>} : memref<1x64xf32, #tpu.memory_space<vmem>>, vector<1x64xf32>,
    %c0_i32_18 = arith.constant 0 : i32
    %23 = arith.cmpi eq, %arg2, %c0_i32_18 : i32
    %24 = arith.extui %23 : i1 to i32
    %c0_i32_19 = arith.constant 0 : i32
    %25 = arith.cmpi ne, %24, %c0_i32_19 : i32
    scf.if %25 {
      %c0_20 = arith.constant 0 : index
      %c0_21 = arith.constant 0 : index
      %26 = vector.load %arg6[%c0_20, %c0_21] : memref<8x1xf32, #tpu.memory_space<vmem>>, vector<8x1xf32>
      %cst_22 = arith.constant 1.000000e-24 : f32
      %27 = vector.broadcast %cst_22 : f32 to vector<8x1xf32>
      %28 = arith.maximumf %26, %27 : vector<8x1xf32>
      %29 = math.rsqrt %28 : vector<8x1xf32>
      %c0_23 = arith.constant 0 : index
      %c0_24 = arith.constant 0 : index
      %30 = vector.load %arg7[%c0_23, %c0_24] : memref<1x64xf32, #tpu.memory_space<vmem>>, vector<1x64xf32>
      %cst_25 = arith.constant 1.000000e-24 : f32
      %31 = vector.broadcast %cst_25 : f32 to vector<1x64xf32>
      %32 = arith.maximumf %30, %31 : vector<1x64xf32>
      %33 = math.rsqrt %32 : vector<1x64xf32>
      %c0_26 = arith.constant 0 : index
      %c0_27 = arith.constant 0 : index
      %34 = vector.load %arg5[%c0_26, %c0_27] : memref<8x64xf32, #tpu.memory_space<vmem>>, vector<8x64xf32>
      %35 = vector.broadcast %29 : vector<8x1xf32> to vector<8x64xf32>
      %36 = arith.mulf %34, %35 : vector<8x64xf32>
      %37 = vector.broadcast %33 : vector<1x64xf32> to vector<8x64xf32>
      %38 = arith.mulf %36, %37 : vector<8x64xf32>
      %cst_28 = arith.constant -1.000000e+00 : f32
      %cst_29 = arith.constant 1.000000e+00 : f32
      %39 = vector.broadcast %cst_28 : f32 to vector<8x64xf32>
      %40 = arith.maximumf %39, %38 : vector<8x64xf32>
      %41 = vector.broadcast %cst_29 : f32 to vector<8x64xf32>
      %42 = arith.minimumf %41, %40 : vector<8x64xf32>
      %c0_30 = arith.constant 0 : index
      %c0_31 = arith.constant 0 : index
      %43 = vector.load %arg5[%c0_30, %c0_31] : memref<8x64xf32, #tpu.memory_space<vmem>>, vector<8x64xf32>
      tpu.vector_store %arg5[%c0_30, %c0_31], %42 {strides = array<i32>} : memref<8x64xf32, #tpu.memory_space<vmem>>, vector<8x64xf32>,
    } else {
    }
    return
  }
  func.func @transform_0(%arg0: i32, %arg1: i32, %arg2: i32) -> (i32, i32) {
    %c0_i32 = arith.constant 0 : i32
    return %arg0, %arg2 : i32, i32
  }
  func.func @transform_1(%arg0: i32, %arg1: i32, %arg2: i32) -> (i32, i32) {
    %c0_i32 = arith.constant 0 : i32
    return %arg2, %arg1 : i32, i32
  }
  func.func @transform_2(%arg0: i32, %arg1: i32, %arg2: i32) -> (i32, i32) {
    %c0_i32 = arith.constant 0 : i32
    return %arg0, %arg1 : i32, i32
  }
}

</mosaic_0001>

<llo_original>
// kernel: fc_cosine.1
$region0: #{fc_cosine.1}
  #allocation0 [shape = 'u32[]', space=smem, size = 0x4, offset = 0x4, fixed_abs, tag = 'smem constant byte address 0x4 - core index']
  #allocation1 [shape = 'u32[72,128]{1,0:T(1,128)}', space=vmem, size = 0x9000, scoped, tag = 'internal scratch']
  #allocation2 [shape = 'f32[8,1]{1,0:T(8,128)}', space=vmem, size = 0x1000, scoped, tag = 'scratch operand']
  #allocation3 [shape = 'f32[1,64]{1,0:T(1,128)}', space=vmem, size = 0x200, scoped, tag = 'scratch operand']
  %s0 = inlined_call_operand.hbm [shape: f32[8,32], index: 0, kind: input, shape index: {}]
  %s1 = inlined_call_operand.hbm [shape: f32[32,64], index: 1, kind: input, shape index: {}]
  %s2 = inlined_call_operand.hbm [shape: f32[8,64], index: 2, kind: output, shape index: {}]
  %s3 = sld [smem:[#allocation0]]
  $region34: #{fc_cosine.1} parent=0
    _
  %s5 = ssub.s32 1, %s3
  %s6 = scalar_select 0, %s5, %s3
  $region1: #{fc_cosine.1} parent=0
    #allocation4 [shape = 'u8[4096]{0}', space=vmem, size = 0x1000, scoped, tag = 'input window, operand 0, single buffered']
    #allocation5 [shape = 's32[1]{0}', space=sflag, size = 0x4, scoped, tag = 'scoped memory for fc_cosine.1']
    #allocation6 [shape = 's32[1]{0}', space=sflag, size = 0x4, scoped, tag = 'scoped memory for fc_cosine.1']
    #allocation7 [shape = 'u8[16384]{0}', space=vmem, size = 0x4000, scoped, tag = 'input window, operand 1, single buffered']
    #allocation8 [shape = 's32[1]{0}', space=sflag, size = 0x4, scoped, tag = 'scoped memory for fc_cosine.1']
    #allocation9 [shape = 'u8[4096]{0}', space=vmem, size = 0x1000, scoped, tag = 'output window, operand 0, single buffered']
    %7 = vsyncpa [#allocation5], 0
    %8 = vsyncpa [#allocation8], 0
    %9 = vsyncpa [#allocation6], 0
    // Predicated region
    $region2: #{fc_cosine.1} parent=1 // pred_check
      _
    $region3: #{fc_cosine.1} parent=1 // pred_check_branch
      %11 = sbr.rel (0) target = $region5
    $region4: #{fc_cosine.1} parent=1 // pred_region
      %13 = vsyncadd [#allocation5], 0
      %s15 = sshll.u32 %s0, 4
      %s16 = int_to_ptr.hbm [resolvable:$true] %s15
      %s17 = sshll.u32 [#allocation4], 4
      %s18 = int_to_ptr.vmem [resolvable:$true] %s17
      %20 = dma.hbm_to_vmem [thread:$0]  %s16, 128, %s18, [#allocation5]
    $region5: #{fc_cosine.1} parent=1 // pred_fallthru
      _
    // Predicated region
    $region6: #{fc_cosine.1} parent=1 // pred_check
      _
    $region7: #{fc_cosine.1} parent=1 // pred_check_branch
      %22 = sbr.rel (0) target = $region9
    $region8: #{fc_cosine.1} parent=1 // pred_region
      %24 = vsyncadd [#allocation8], 0
      %s25 = sshll.u32 %s1, 4
      %s26 = int_to_ptr.hbm [resolvable:$true] %s25
      %s27 = sshll.u32 [#allocation7], 4
      %s28 = int_to_ptr.vmem [resolvable:$true] %s27
      %33 = dma.hbm_to_vmem [thread:$0]  %s26, 512, %s28, [#allocation8], 128, 128, 8
    $region9: #{fc_cosine.1} parent=1 // pred_fallthru
      _
    // Predicated region
    $region10: #{fc_cosine.1} parent=1 // pred_check
      _
    $region11: #{fc_cosine.1} parent=1 // pred_check_branch
      %35 = sbr.rel (0) target = $region13
    $region12: #{fc_cosine.1} parent=1 // pred_region
      %37 = dma.done [#allocation5], 128
    $region13: #{fc_cosine.1} parent=1 // pred_fallthru
      _
    // Predicated region
    $region14: #{fc_cosine.1} parent=1 // pred_check
      _
    $region15: #{fc_cosine.1} parent=1 // pred_check_branch
      %39 = sbr.rel (0) target = $region17
    $region16: #{fc_cosine.1} parent=1 // pred_region
      %41 = dma.done [#allocation8], 512
    $region17: #{fc_cosine.1} parent=1 // pred_fallthru
      _
    %p43 = scmp.eq.s32.totalorder 0, 0
    // Predicated region
    $region18: #{fc_cosine.1} parent=1 // pred_check
      %p44 = pneg %p43
    $region19: #{fc_cosine.1} parent=1 // pred_check_branch
      %46 = sbr.rel (%p44) target = $region21
    $region20: #{fc_cosine.1} parent=1 // pred_region
      %vm47 = vcmask 523264
      %48 = vst.msk [vmem:[#allocation9] sm:$0xff] %vm47, 0.0
      %vm49 = vcmask 7168
      %50 = vst.msk [vmem:[#allocation2] sm:$0xff] %vm49, 0.0
      %vm51 = vcmask 516096
      %52 = vst.msk [vmem:[#allocation3] sm:$0x1] %vm51, 0.0
    $region21: #{fc_cosine.1} parent=1 // pred_fallthru
      _
    %v53 = vld [vmem:[#allocation4] sm:$0xff]
    %v54 = vld [vmem:[#allocation7] sm:$0xff]
    %v55 = vld [vmem:[#allocation7 + $0x8] sm:$0xff]
    %v56 = vld [vmem:[#allocation7 + $0x10] sm:$0xff]
    %v57 = vld [vmem:[#allocation7 + $0x18] sm:$0xff]
    %v58 = vpack.c.bf16 %v53, %v53
    %v59 = vpack.c.bf16 %v55, %v54
    %v60 = vpack.c.bf16 %v57, %v56
    %vm61 = vcmask 261120
    %v63 = vsel %vm61, %v58, 0
    %65 = vmatpush.bf16.msra.mxu0 0
    %66 = vmatpush.bf16.msra.mxu0 0
    %67 = vmatpush.bf16.msra.mxu0 0
    %68 = vmatpush.bf16.msra.mxu0 0
    %69 = vmatpush.bf16.msra.mxu0 0
    %70 = vmatpush.bf16.msra.mxu0 0
    %71 = vmatpush.bf16.msra.mxu0 %v60
    %72 = vmatpush.bf16.msra.mxu0 %v59
    %73 = vmatmul.bf16.gmra.mxu0 %v63
    %v74 = vpop.f32.mrf.mxu0
    %v75 = vadd.f32 0.0, %v74
    %v76 = vpop.f32.mrf.mxu0
    %77 = vdwg.mxu0
    %v78 = vld [vmem:[#allocation9] sm:$0xff]
    %v79 = vadd.f32 %v78, %v75
    %vm80 = vcmask 523264
    %81 = vst.msk [vmem:[#allocation9] sm:$0xff] %vm80, %v79
    %v82 = vld [vmem:[#allocation2] sm:$0xff]
    %v83 = vmul.f32 %v53, %v53
    %v84 = vsel %vm61, %v83, 0.0
    %85 = vadd.xlane.f32.xlu0 %v84
    %v86 = vpop.xlane.xlu0 %85
    %v87 = vadd.f32 %v82, %v86
    %vm88 = vcmask 7168
    %89 = vst.msk [vmem:[#allocation2] sm:$0xff] %vm88, %v87
    %v90 = vld [vmem:[#allocation3] sm:$0x1]
    %v91 = vmul.f32 %v54, %v54
    %v92 = vmul.f32 %v55, %v55
    %v93 = vmul.f32 %v56, %v56
    %v94 = vmul.f32 %v57, %v57
    %v95 = vsel %vm80, %v91, 0.0
    %v96 = vsel %vm80, %v92, 0.0
    %v97 = vadd.f32 %v95, %v96
    %v98 = vsel %vm80, %v93, 0.0
    %v99 = vadd.f32 %v97, %v98
    %v100 = vsel %vm80, %v94, 0.0
    %v101 = vadd.f32 %v99, %v100
    %v102 = vrot.slane %v101, 4
    %v103 = vadd.f32 %v101, %v102
    %v104 = vrot.slane %v103, 2
    %v105 = vadd.f32 %v103, %v104
    %v106 = vrot.slane %v105, 1
    %v107 = vadd.f32 %v105, %v106
    %v108 = vadd.f32 %v90, %v107
    %vm109 = vcmask 516096
    %110 = vst.msk [vmem:[#allocation3] sm:$0x1] %vm109, %v108
    // Predicated region
    $region22: #{fc_cosine.1} parent=1 // pred_check
      %p111 = pneg %p43
    $region23: #{fc_cosine.1} parent=1 // pred_check_branch
      %113 = sbr.rel (%p111) target = $region25
    $region24: #{fc_cosine.1} parent=1 // pred_region
      %v114 = vld [vmem:[#allocation2] sm:$0xff]
      %v115 = vmax.f32 %v114, 1e-24
      %v116 = vrsqrt.pop %v115
      %v117 = vmul.f32 %v116, %v115
      %v118 = vmul.f32 %v117, %v116
      %v119 = vmul.f32 0.5, %v118
      %v120 = vsub.f32 1.5, %v119
      %v121 = vmul.f32 %v116, %v120
      %vm122 = vweird.f32 %v115
      %vm123 = vweird.f32 %v116
      %vm124 = vmor %vm122, %vm123
      %v125 = vsel %vm124, %v116, %v121
      %v126 = vld [vmem:[#allocation3] sm:$0x1]
      %v127 = vmax.f32 %v126, 1e-24
      %v128 = vrsqrt.pop %v127
      %v129 = vmul.f32 %v128, %v127
      %v130 = vmul.f32 %v129, %v128
      %v131 = vmul.f32 0.5, %v130
      %v132 = vsub.f32 1.5, %v131
      %v133 = vmul.f32 %v128, %v132
      %vm134 = vweird.f32 %v127
      %vm135 = vweird.f32 %v128
      %vm136 = vmor %vm134, %vm135
      %v137 = vsel %vm136, %v128, %v133
      %v138 = vld [vmem:[#allocation9] sm:$0xff]
      %140 = vset.pattern.permute.xlu0 0
      %141 = vperm.xlu0 %140, %v125
      %v142 = vpop.permute.xlu0 %141
      %v144 = vmul.f32 %v138, %v142
      %v146 = vperm.slane %v137, 0
      %v148 = vmul.f32 %v144, %v146
      %v149 = vmax.f32 %v148, -1.0
      %v150 = vmin.f32 %v149, 1.0
      %151 = vst.msk [vmem:[#allocation9] sm:$0xff] %vm80, %v150
    $region25: #{fc_cosine.1} parent=1 // pred_fallthru
      _
    // Predicated region
    $region26: #{fc_cosine.1} parent=1 // pred_check
      _
    $region27: #{fc_cosine.1} parent=1 // pred_check_branch
      %153 = sbr.rel (0) target = $region29
    $region28: #{fc_cosine.1} parent=1 // pred_region
      %155 = vsyncadd [#allocation6], 0
      %s157 = sshll.u32 [#allocation9], 4
      %s158 = int_to_ptr.vmem [resolvable:$true] %s157
      %s159 = sshll.u32 %s2, 4
      %s160 = int_to_ptr.hbm [resolvable:$true] %s159
      %162 = dma.vmem_to_hbm [thread:$0]  %s158, 128, %s160, [#allocation6]
    $region29: #{fc_cosine.1} parent=1 // pred_fallthru
      _
    // Predicated region
    $region30: #{fc_cosine.1} parent=1 // pred_check
      _
    $region31: #{fc_cosine.1} parent=1 // pred_check_branch
      %164 = sbr.rel (0) target = $region33
    $region32: #{fc_cosine.1} parent=1 // pred_region
      %166 = dma.done [#allocation6], 128
    $region33: #{fc_cosine.1} parent=1 // pred_fallthru
      _
    %167 = vsyncpa [#allocation5], 1
    %168 = vsyncpa [#allocation8], 1
    %169 = vsyncpa [#allocation6], 1

</llo_original>
